<compile_context>
chip_gen: v5e
topology: v5e:2x2
jax: 0.10.0
libtpu: 0.0.40
codegen_flags: <defaults>
</compile_context>

<pallas_src>
import functools

import jax
import jax.numpy as jnp
from jax.experimental import pallas as pl
from jax.experimental.pallas import tpu as pltpu


# Per-row statistics each loss needs (computed over the feature axis):
#   ssd = sum((x-y)^2), sad = sum(|x-y|), dot = sum(x*y),
#   nsq = sum(x*x) * sum(y*y)   (squared product of norms)
_STATS_FOR_LOSS = {
    "mse": ("ssd",),
    "mae": ("sad",),
    "dot": ("dot",),
    "cosine": ("dot", "nsq"),
    "cosine_mse": ("ssd", "dot", "nsq"),
}


def _round_up(n, m):
    return ((n + m - 1) // m) * m


def _choose_b_tile(B, D, itemsize):
    """Rows per tile: 2 inputs x 2 pipeline buffers x rows x D x itemsize
    kept under a ~12 MiB budget (safe for v5e's 16 MiB scoped-VMEM default and
    v7x's 32 MiB scoped limit), capped at 1024 rows, multiple of 8 sublanes."""
    budget = 12 * 1024 * 1024
    rows = budget // (4 * D * itemsize)
    rows = max(8, min(rows, 1024, _round_up(B, 8)))
    return (rows // 8) * 8


def _direction_reduce_kernel(x_ref, y_ref, out_ref, *, stats):
    """Per-row reductions over the feature axis for one (B_TILE, D) tile.

    Writes one f32 column per requested statistic into out_ref (B_TILE, n_stats).
    """
    x = x_ref[...].astype(jnp.float32)
    y = y_ref[...].astype(jnp.float32)

    d = None
    if "ssd" in stats or "sad" in stats:
        d = x - y

    for idx, name in enumerate(stats):
        if name == "ssd":
            col = jnp.sum(d * d, axis=-1, keepdims=True)
        elif name == "sad":
            col = jnp.sum(jnp.abs(d), axis=-1, keepdims=True)
        elif name == "dot":
            col = jnp.sum(x * y, axis=-1, keepdims=True)
        elif name == "nsq":
            xx = jnp.sum(x * x, axis=-1, keepdims=True)
            yy = jnp.sum(y * y, axis=-1, keepdims=True)
            col = xx * yy
        else:
            raise ValueError(f"unknown stat: {name}")
        out_ref[:, idx:idx + 1] = col


def _row_reductions(x, y, stats):
    """Returns a dict of per-row f32 statistics, each of shape (B,)."""
    B, D = x.shape
    n_stats = len(stats)
    itemsize = jnp.dtype(x.dtype).itemsize
    b_tile = _choose_b_tile(B, D, itemsize)

    # Pad batch to a multiple of the tile; zero rows contribute nothing and are
    # sliced away below, so all losses stay exact.
    B_pad = _round_up(B, b_tile)
    if B_pad != B:
        pad = ((0, B_pad - B), (0, 0))
        x = jnp.pad(x, pad)
        y = jnp.pad(y, pad)

    grid = (B_pad // b_tile,)
    in_spec = pl.BlockSpec((b_tile, D), lambda i: (i, 0))
    out_spec = pl.BlockSpec((b_tile, n_stats), lambda i: (i, 0))

    out = pl.pallas_call(
        functools.partial(_direction_reduce_kernel, stats=stats),
        out_shape=jax.ShapeDtypeStruct((B_pad, n_stats), jnp.float32),
        grid_spec=pltpu.PrefetchScalarGridSpec(
            num_scalar_prefetch=0,
            grid=grid,
            in_specs=[in_spec, in_spec],
            out_specs=out_spec,
        ),
        compiler_params=pltpu.CompilerParams(
            dimension_semantics=("parallel",)),
    )(x, y)

    out = out[:B]
    return {name: out[:, i] for i, name in enumerate(stats)}


@functools.partial(jax.jit, static_argnames=("loss_type", "mse_scale"))
def direction_loss(x, y, loss_type="mse", mse_scale=0.5):
    """Mirror of DirectionLoss.forward for 2-D inputs [B, D].

    Output shapes (matching PyTorch):
      mse, mae           -> scalar ()
      cosine, dot        -> (B,)
      cosine_mse         -> (B,)   (scalar mse broadcast against per-row cosine)
    """
    if loss_type not in _STATS_FOR_LOSS:
        raise ValueError(f"unknown loss_type: {loss_type}")
    B, D = x.shape
    stats = _STATS_FOR_LOSS[loss_type]
    col = _row_reductions(x, y, stats)

    n_elem = jnp.float32(B * D)
    eps = jnp.float32(1e-8)  # F.cosine_similarity default eps

    if loss_type == "mse":
        return jnp.sum(col["ssd"]) / n_elem
    if loss_type == "mae":
        return jnp.sum(col["sad"]) / n_elem
    if loss_type == "dot":
        return -1.0 * col["dot"]

    # cosine / cosine_mse: ATen-style denominator sqrt(clamp(xx*yy, eps^2))
    cos = col["dot"] / jnp.sqrt(jnp.maximum(col["nsq"], eps * eps))
    if loss_type == "cosine":
        return 1.0 - cos
    # cosine_mse
    mse = jnp.sum(col["ssd"]) / n_elem
    return mse_scale * mse + (1.0 - mse_scale) * (1.0 - cos)


if __name__ == "__main__":
    # DirectionLoss has no learnable parameters; just build deterministic inputs.
    key = jax.random.PRNGKey(0)
    kx, ky = jax.random.split(key)
    B, D = 10, 512  # CLIP-like feature dim; B=10 exercises the tile-padding path
    x = jax.random.normal(kx, (B, D), dtype=jnp.float32)
    y = jax.random.normal(ky, (B, D), dtype=jnp.float32)

    results = {}
    for lt in ("mse", "mae", "cosine", "dot", "cosine_mse"):
        out = direction_loss(x, y, loss_type=lt, mse_scale=0.5)
        jax.block_until_ready(out)
        results[lt] = out

    # Pure-JAX references.
    ref_mse = jnp.mean((x - y) ** 2)
    ref_mae = jnp.mean(jnp.abs(x - y))
    ref_dot = jnp.sum(x * y, -1)
    ref_nsq = jnp.sum(x * x, -1) * jnp.sum(y * y, -1)
    ref_cos = ref_dot / jnp.sqrt(jnp.maximum(ref_nsq, 1e-16))

    assert jnp.allclose(results["mse"], ref_mse, rtol=1e-5, atol=1e-5)
    assert jnp.allclose(results["mae"], ref_mae, rtol=1e-5, atol=1e-5)
    assert jnp.allclose(results["cosine"], 1.0 - ref_cos, rtol=1e-5, atol=1e-5)
    assert jnp.allclose(results["dot"], -ref_dot, rtol=1e-5, atol=1e-4)
    assert jnp.allclose(
        results["cosine_mse"], 0.5 * ref_mse + 0.5 * (1.0 - ref_cos),
        rtol=1e-5, atol=1e-5)

    # bf16 inputs (half the HBM traffic; f32 accumulation inside the kernel).
    xb, yb = x.astype(jnp.bfloat16), y.astype(jnp.bfloat16)
    out_bf16 = direction_loss(xb, yb, loss_type="mse")
    jax.block_until_ready(out_bf16)
    ref_bf16 = jnp.mean((xb.astype(jnp.float32) - yb.astype(jnp.float32)) ** 2)
    assert jnp.allclose(out_bf16, ref_bf16, rtol=2e-2, atol=2e-2)

    print("KERNEL_OK")
</pallas_src>

<mosaic_0001>
module attributes {stable_mosaic.version = 11 : i64} {
  func.func @_direction_reduce_kernel(%arg0: i32, %arg1: memref<16x512xf32, #tpu.memory_space<vmem>>, %arg2: memref<16x512xf32, #tpu.memory_space<vmem>>, %arg3: memref<16x1xf32, #tpu.memory_space<vmem>>) attributes {dimension_semantics = [#tpu.dimension_semantics<parallel>], iteration_bounds = array<i64: 1>, scalar_prefetch = 0 : i64, scratch_operands = 0 : i64, tpu.core_type = #tpu.core_type<tc>, window_params = [{transform_indices = @transform_0, window_bounds = array<i64: 16, 512>}, {transform_indices = @transform_1, window_bounds = array<i64: 16, 512>}, {transform_indices = @transform_2, window_bounds = array<i64: 16, 1>}]} {
    %c0 = arith.constant 0 : index
    %c0_0 = arith.constant 0 : index
    %0 = vector.load %arg1[%c0, %c0_0] : memref<16x512xf32, #tpu.memory_space<vmem>>, vector<16x512xf32>
    %c0_1 = arith.constant 0 : index
    %c0_2 = arith.constant 0 : index
    %1 = vector.load %arg2[%c0_1, %c0_2] : memref<16x512xf32, #tpu.memory_space<vmem>>, vector<16x512xf32>
    %2 = arith.subf %0, %1 : vector<16x512xf32>
    %3 = arith.mulf %2, %2 : vector<16x512xf32>
    %cst = arith.constant dense<0.000000e+00> : vector<16xf32>
    %4 = vector.multi_reduction <add>, %3, %cst [1] : vector<16x512xf32> to vector<16xf32>
    %5 = vector.shape_cast %4 : vector<16xf32> to vector<16x1xf32>
    %c0_3 = arith.constant 0 : index
    %c0_4 = arith.constant 0 : index
    %6 = vector.load %arg3[%c0_3, %c0_4] : memref<16x1xf32, #tpu.memory_space<vmem>>, vector<16x1xf32>
    tpu.vector_store %arg3[%c0_3, %c0_4], %5 {strides = array<i32>} : memref<16x1xf32, #tpu.memory_space<vmem>>, vector<16x1xf32>,
    return
  }
  func.func @transform_0(%arg0: i32) -> (i32, i32) {
    %c0_i32 = arith.constant 0 : i32
    %c0_i32_0 = arith.constant 0 : i32
    return %arg0, %c0_i32 : i32, i32
  }
  func.func @transform_1(%arg0: i32) -> (i32, i32) {
    %c0_i32 = arith.constant 0 : i32
    %c0_i32_0 = arith.constant 0 : i32
    return %arg0, %c0_i32 : i32, i32
  }
  func.func @transform_2(%arg0: i32) -> (i32, i32) {
    %c0_i32 = arith.constant 0 : i32
    %c0_i32_0 = arith.constant 0 : i32
    return %arg0, %c0_i32 : i32, i32
  }
}

</mosaic_0001>

<llo_original>
// kernel: direction_loss.1
$region0: #{direction_loss.1}
  #allocation0 [shape = 'u32[]', space=smem, size = 0x4, offset = 0x4, fixed_abs, tag = 'smem constant byte address 0x4 - core index']
  #allocation1 [shape = 'u32[72,128]{1,0:T(1,128)}', space=vmem, size = 0x9000, scoped, tag = 'internal scratch']
  %s0 = inlined_call_operand.vmem [shape: f32[16,512], index: 0, kind: input, shape index: {}]
  %s1 = inlined_call_operand.vmem [shape: f32[16,512], index: 1, kind: input, shape index: {}]
  %s2 = inlined_call_operand.vmem [shape: f32[16,1], index: 2, kind: output, shape index: {}]
  %s3 = sld [smem:[#allocation0]]
  $region18: #{direction_loss.1} parent=0
    _
  %s5 = ssub.s32 1, %s3
  %s6 = scalar_select 0, %s5, %s3
  // Predicated region
  $region2: #{direction_loss.1} parent=0 // pred_check
    _
  $region3: #{direction_loss.1} parent=0 // pred_check_branch
    %8 = sbr.rel (0) target = $region5
  $region4: #{direction_loss.1} parent=0 // pred_region
    _
  $region5: #{direction_loss.1} parent=0 // pred_fallthru
    _
  // Predicated region
  $region6: #{direction_loss.1} parent=0 // pred_check
    _
  $region7: #{direction_loss.1} parent=0 // pred_check_branch
    %10 = sbr.rel (0) target = $region9
  $region8: #{direction_loss.1} parent=0 // pred_region
    _
  $region9: #{direction_loss.1} parent=0 // pred_fallthru
    _
  %v11 = vld [vmem:[%s0] sm:$0xff]
  %v12 = vld [vmem:[%s0 + $0x8] sm:$0xff]
  %v13 = vld [vmem:[%s0 + $0x10] sm:$0xff]
  %v14 = vld [vmem:[%s0 + $0x18] sm:$0xff]
  %v15 = vld [vmem:[%s0 + $0x20] sm:$0xff]
  %v16 = vld [vmem:[%s0 + $0x28] sm:$0xff]
  %v17 = vld [vmem:[%s0 + $0x30] sm:$0xff]
  %v18 = vld [vmem:[%s0 + $0x38] sm:$0xff]
  %v19 = vld [vmem:[%s1] sm:$0xff]
  %v20 = vld [vmem:[%s1 + $0x8] sm:$0xff]
  %v21 = vld [vmem:[%s1 + $0x10] sm:$0xff]
  %v22 = vld [vmem:[%s1 + $0x18] sm:$0xff]
  %v23 = vld [vmem:[%s1 + $0x20] sm:$0xff]
  %v24 = vld [vmem:[%s1 + $0x28] sm:$0xff]
  %v25 = vld [vmem:[%s1 + $0x30] sm:$0xff]
  %v26 = vld [vmem:[%s1 + $0x38] sm:$0xff]
  %v27 = vsub.f32 %v11, %v19
  %v28 = vsub.f32 %v12, %v20
  %v29 = vsub.f32 %v13, %v21
  %v30 = vsub.f32 %v14, %v22
  %v31 = vsub.f32 %v15, %v23
  %v32 = vsub.f32 %v16, %v24
  %v33 = vsub.f32 %v17, %v25
  %v34 = vsub.f32 %v18, %v26
  %v35 = vmul.f32 %v27, %v27
  %v36 = vmul.f32 %v28, %v28
  %v37 = vmul.f32 %v29, %v29
  %v38 = vmul.f32 %v30, %v30
  %v39 = vmul.f32 %v31, %v31
  %v40 = vmul.f32 %v32, %v32
  %v41 = vmul.f32 %v33, %v33
  %v42 = vmul.f32 %v34, %v34
  %v43 = vadd.f32 %v35, %v36
  %v44 = vadd.f32 %v43, %v37
  %v45 = vadd.f32 %v44, %v38
  %46 = vadd.xlane.f32.xlu0 %v45
  %v47 = vpop.xlane.xlu0 %46
  %v48 = vadd.f32 %v39, %v40
  %v49 = vadd.f32 %v48, %v41
  %v50 = vadd.f32 %v49, %v42
  %51 = vadd.xlane.f32.xlu0 %v50
  %v52 = vpop.xlane.xlu0 %51
  %vm53 = vcmask 7168
  %54 = vst.msk [vmem:[%s2] sm:$0xff] %vm53, %v47
  %55 = vst.msk [vmem:[%s2 + $0x8] sm:$0xff] %vm53, %v52
  // Predicated region
  $region10: #{direction_loss.1} parent=0 // pred_check
    _
  $region11: #{direction_loss.1} parent=0 // pred_check_branch
    %57 = sbr.rel (0) target = $region13
  $region12: #{direction_loss.1} parent=0 // pred_region
    _
  $region13: #{direction_loss.1} parent=0 // pred_fallthru
    _
  // Predicated region
  $region14: #{direction_loss.1} parent=0 // pred_check
    _
  $region15: #{direction_loss.1} parent=0 // pred_check_branch
    %59 = sbr.rel (0) target = $region17
  $region16: #{direction_loss.1} parent=0 // pred_region
    _
  $region17: #{direction_loss.1} parent=0 // pred_fallthru
    _

</llo_original>
